<compile_context>
chip_gen: v7x
topology: tpu7x:2x2x1
jax: 0.10.0
libtpu: 0.0.40
codegen_flags: <defaults>
</compile_context>

<pallas_src>
import jax
import jax.numpy as jnp
from jax.experimental import pallas as pl
from jax.experimental.pallas import tpu as pltpu

EPS = 1e-5
NEG = -1e30  # finite "-inf" for padded logit lanes (exp underflows to exactly 0)


def mlp_kernel(x_ref, w1_ref, b1_ref, w2_ref, b2_ref, o_ref):
    # fc1: bf16 operands, f32 MXU accumulation, f32 bias + ReLU.
    h = jnp.dot(x_ref[...], w1_ref[...],
                preferred_element_type=jnp.float32) + b1_ref[...]
    h = jnp.maximum(h, 0.0)
    # BatchNorm1d (eval, running stats) is folded into w2/b2 in the wrapper.
    # fc2: bf16 operands, f32 accumulation, folded f32 bias.
    logits = jnp.dot(h.astype(jnp.bfloat16), w2_ref[...],
                     preferred_element_type=jnp.float32) + b2_ref[...]
    # Numerically stable LogSoftmax over the (lane-padded) output dim.
    # Padded lanes have bias NEG -> they never win the max and exp() is exactly 0.
    m = jnp.max(logits, axis=-1, keepdims=True)
    s = logits - m
    lse = jnp.log(jnp.sum(jnp.exp(s), axis=-1, keepdims=True))
    o_ref[...] = (s - lse).astype(o_ref.dtype)


def mlp_forward(x, w1, b1, gamma, beta, running_mean, running_var, w2, b2):
    B, dim_in = x.shape
    dim_hidden = w1.shape[1]
    dim_out = w2.shape[1]

    # --- Fold eval-mode BatchNorm1d into the second GEMM (exact affine fold, f32).
    scale = gamma * jax.lax.rsqrt(running_var + EPS)     # (1, H)
    shift = beta - running_mean * scale                  # (1, H)
    w2_f = scale.reshape(dim_hidden, 1) * w2             # (H, Dout)
    b2_f = shift @ w2 + b2                               # (1, Dout)

    # --- Lane-dense output: pad Dout up to a multiple of 128.
    out_pad = pl.cdiv(dim_out, 128) * 128
    if out_pad > dim_out:
        w2_f = jnp.concatenate(
            [w2_f, jnp.zeros((dim_hidden, out_pad - dim_out), w2_f.dtype)], axis=1)
        b2_f = jnp.concatenate(
            [b2_f, jnp.full((1, out_pad - dim_out), NEG, b2_f.dtype)], axis=1)

    # --- Batch tiling: sublane-aligned tiles, weights stay VMEM-resident across
    # the grid. TB=256 keeps the activation/tile VMEM footprint small enough for
    # v7x's 64 MiB VMEM at realistic layer sizes; toy B just uses one tile.
    tb = min(256, pl.cdiv(B, 8) * 8)
    b_pad = pl.cdiv(B, tb) * tb
    if b_pad > B:
        x = jnp.concatenate(
            [x, jnp.zeros((b_pad - B, dim_in), x.dtype)], axis=0)
    grid = (b_pad // tb,)

    # --- bf16 GEMM operands, f32 biases.
    x_bf = x.astype(jnp.bfloat16)
    w1_bf = w1.astype(jnp.bfloat16)
    w2_bf = w2_f.astype(jnp.bfloat16)
    b1_f32 = b1.astype(jnp.float32)
    b2_f32 = b2_f.astype(jnp.float32)

    args = (x_bf, w1_bf, b1_f32, w2_bf, b2_f32)
    bytes_accessed = int(sum(a.size * a.dtype.itemsize for a in args)
                         + b_pad * out_pad * 4)
    cost = pl.CostEstimate(
        flops=int(2 * b_pad * (dim_in * dim_hidden + dim_hidden * out_pad)),
        transcendentals=int(b_pad * out_pad),
        bytes_accessed=bytes_accessed,
    )

    out = pl.pallas_call(
        mlp_kernel,
        out_shape=jax.ShapeDtypeStruct((b_pad, out_pad), jnp.float32),
        grid_spec=pltpu.PrefetchScalarGridSpec(
            num_scalar_prefetch=0,
            grid=grid,
            in_specs=[
                pl.BlockSpec((tb, dim_in), lambda i: (i, 0)),          # x tile
                pl.BlockSpec((dim_in, dim_hidden), lambda i: (0, 0)),  # w1 (resident)
                pl.BlockSpec((1, dim_hidden), lambda i: (0, 0)),       # b1 (resident)
                pl.BlockSpec((dim_hidden, out_pad), lambda i: (0, 0)), # w2' (resident)
                pl.BlockSpec((1, out_pad), lambda i: (0, 0)),          # b2' (resident)
            ],
            out_specs=pl.BlockSpec((tb, out_pad), lambda i: (i, 0)),
        ),
        compiler_params=pltpu.CompilerParams(
            # Independent batch tiles -> shard across v7x's two TensorCores;
            # harmless on single-core v5e/v6e.
            dimension_semantics=("parallel",),
        ),
        cost_estimate=cost,
    )(*args)
    return out[:B, :dim_out]


def reference_forward(x, w1, b1, gamma, beta, running_mean, running_var, w2, b2):
    h = x @ w1 + b1
    h = jnp.maximum(h, 0.0)
    h = (h - running_mean) / jnp.sqrt(running_var + EPS) * gamma + beta
    logits = h @ w2 + b2
    return jax.nn.log_softmax(logits, axis=-1)


if __name__ == "__main__":
    B, dim_in, dim_hidden, dim_out = 8, 32, 64, 16

    key = jax.random.PRNGKey(0)
    kx, kw1, kb1, kw2, kb2, kg, kbt = jax.random.split(key, 7)

    x = jax.random.normal(kx, (B, dim_in), dtype=jnp.float32)

    # Deterministic parameter init (shapes follow nn.Linear / nn.BatchNorm1d).
    # Linear weights stored as [in, out] (transposed vs. PyTorch [out, in]).
    lim1 = 1.0 / (dim_in ** 0.5)
    w1 = jax.random.uniform(kw1, (dim_in, dim_hidden), minval=-lim1, maxval=lim1)
    b1 = jax.random.uniform(kb1, (1, dim_hidden), minval=-lim1, maxval=lim1)
    lim2 = 1.0 / (dim_hidden ** 0.5)
    w2 = jax.random.uniform(kw2, (dim_hidden, dim_out), minval=-lim2, maxval=lim2)
    b2 = jax.random.uniform(kb2, (1, dim_out), minval=-lim2, maxval=lim2)

    # BatchNorm1d params (default init gamma=1, beta=0, mean=0, var=1; perturbed
    # deterministically so the BN fold is actually exercised).
    gamma = 1.0 + 0.1 * jax.random.normal(kg, (1, dim_hidden))
    beta = 0.1 * jax.random.normal(kbt, (1, dim_hidden))
    running_mean = 0.05 * jnp.ones((1, dim_hidden), jnp.float32)
    running_var = 1.1 * jnp.ones((1, dim_hidden), jnp.float32)

    out = mlp_forward(x, w1, b1, gamma, beta, running_mean, running_var, w2, b2)
    out = jax.block_until_ready(out)

    ref = reference_forward(x, w1, b1, gamma, beta, running_mean, running_var,
                            w2, b2)
    assert out.shape == (B, dim_out)
    # Tolerance loosened vs. the pure-f32 reference because GEMM operands are bf16.
    assert jnp.allclose(out, ref, atol=2e-2, rtol=2e-2), "mismatch vs reference"
    print("KERNEL_OK")
</pallas_src>

<mosaic_0001>
module attributes {stable_mosaic.version = 11 : i64} {
  func.func @mlp_kernel(%arg0: i32, %arg1: memref<8x32xbf16, #tpu.memory_space<vmem>>, %arg2: memref<32x64xbf16, #tpu.memory_space<vmem>>, %arg3: memref<1x64xf32, #tpu.memory_space<vmem>>, %arg4: memref<64x128xbf16, #tpu.memory_space<vmem>>, %arg5: memref<1x128xf32, #tpu.memory_space<vmem>>, %arg6: memref<8x128xf32, #tpu.memory_space<vmem>>) attributes {dimension_semantics = [#tpu.dimension_semantics<parallel>], iteration_bounds = array<i64: 1>, scalar_prefetch = 0 : i64, scratch_operands = 0 : i64, tpu.core_type = #tpu.core_type<tc>, window_params = [{transform_indices = @transform_0, window_bounds = array<i64: 8, 32>}, {pipeline_mode = #tpu.pipeline_mode<synchronous>, transform_indices = @transform_1, window_bounds = array<i64: 32, 64>}, {pipeline_mode = #tpu.pipeline_mode<synchronous>, transform_indices = @transform_2, window_bounds = array<i64: 1, 64>}, {pipeline_mode = #tpu.pipeline_mode<synchronous>, transform_indices = @transform_3, window_bounds = array<i64: 64, 128>}, {pipeline_mode = #tpu.pipeline_mode<synchronous>, transform_indices = @transform_4, window_bounds = array<i64: 1, 128>}, {transform_indices = @transform_5, window_bounds = array<i64: 8, 128>}]} {
    %c0 = arith.constant 0 : index
    %c0_0 = arith.constant 0 : index
    %0 = vector.load %arg1[%c0, %c0_0] : memref<8x32xbf16, #tpu.memory_space<vmem>>, vector<8x32xbf16>
    %c0_1 = arith.constant 0 : index
    %c0_2 = arith.constant 0 : index
    %1 = vector.load %arg2[%c0_1, %c0_2] : memref<32x64xbf16, #tpu.memory_space<vmem>>, vector<32x64xbf16>
    %cst = arith.constant dense<0.000000e+00> : vector<8x64xf32>
    %2 = tpu.matmul %0, %1, %cst {dimension_numbers = #tpu.dot_dimension_numbers<[1], [0], [0], [1], [0, 0, 1, 1], [], []>} : vector<8x32xbf16>, vector<32x64xbf16>, vector<8x64xf32> -> vector<8x64xf32>
    %c0_3 = arith.constant 0 : index
    %c0_4 = arith.constant 0 : index
    %3 = vector.load %arg3[%c0_3, %c0_4] : memref<1x64xf32, #tpu.memory_space<vmem>>, vector<1x64xf32>
    %4 = vector.broadcast %3 : vector<1x64xf32> to vector<8x64xf32>
    %5 = arith.addf %2, %4 : vector<8x64xf32>
    %cst_5 = arith.constant 0.000000e+00 : f32
    %6 = vector.broadcast %cst_5 : f32 to vector<8x64xf32>
    %7 = arith.maximumf %5, %6 : vector<8x64xf32>
    %8 = arith.truncf %7 : vector<8x64xf32> to vector<8x64xbf16>
    %c0_6 = arith.constant 0 : index
    %c0_7 = arith.constant 0 : index
    %9 = vector.load %arg4[%c0_6, %c0_7] : memref<64x128xbf16, #tpu.memory_space<vmem>>, vector<64x128xbf16>
    %cst_8 = arith.constant dense<0.000000e+00> : vector<8x128xf32>
    %10 = tpu.matmul %8, %9, %cst_8 {dimension_numbers = #tpu.dot_dimension_numbers<[1], [0], [0], [1], [0, 0, 1, 1], [], []>} : vector<8x64xbf16>, vector<64x128xbf16>, vector<8x128xf32> -> vector<8x128xf32>
    %c0_9 = arith.constant 0 : index
    %c0_10 = arith.constant 0 : index
    %11 = vector.load %arg5[%c0_9, %c0_10] : memref<1x128xf32, #tpu.memory_space<vmem>>, vector<1x128xf32>
    %12 = vector.broadcast %11 : vector<1x128xf32> to vector<8x128xf32>
    %13 = arith.addf %10, %12 : vector<8x128xf32>
    %cst_11 = arith.constant dense<0xFF800000> : vector<8xf32>
    %14 = vector.multi_reduction <maximumf>, %13, %cst_11 [1] : vector<8x128xf32> to vector<8xf32>
    %15 = vector.shape_cast %14 : vector<8xf32> to vector<8x1xf32>
    %16 = vector.broadcast %15 : vector<8x1xf32> to vector<8x128xf32>
    %17 = arith.subf %13, %16 : vector<8x128xf32>
    %18 = math.exp %17 : vector<8x128xf32>
    %cst_12 = arith.constant dense<0.000000e+00> : vector<8xf32>
    %19 = vector.multi_reduction <add>, %18, %cst_12 [1] : vector<8x128xf32> to vector<8xf32>
    %20 = vector.shape_cast %19 : vector<8xf32> to vector<8x1xf32>
    %21 = math.log %20 : vector<8x1xf32>
    %22 = vector.broadcast %21 : vector<8x1xf32> to vector<8x128xf32>
    %23 = arith.subf %17, %22 : vector<8x128xf32>
    %c0_13 = arith.constant 0 : index
    %c0_14 = arith.constant 0 : index
    %24 = vector.load %arg6[%c0_13, %c0_14] : memref<8x128xf32, #tpu.memory_space<vmem>>, vector<8x128xf32>
    tpu.vector_store %arg6[%c0_13, %c0_14], %23 {strides = array<i32>} : memref<8x128xf32, #tpu.memory_space<vmem>>, vector<8x128xf32>,
    return
  }
  func.func @transform_0(%arg0: i32) -> (i32, i32) {
    %c0_i32 = arith.constant 0 : i32
    %c0_i32_0 = arith.constant 0 : i32
    return %arg0, %c0_i32 : i32, i32
  }
  func.func @transform_1(%arg0: i32) -> (i32, i32) {
    %c0_i32 = arith.constant 0 : i32
    %c0_i32_0 = arith.constant 0 : i32
    %c0_i32_1 = arith.constant 0 : i32
    return %c0_i32, %c0_i32_0 : i32, i32
  }
  func.func @transform_2(%arg0: i32) -> (i32, i32) {
    %c0_i32 = arith.constant 0 : i32
    %c0_i32_0 = arith.constant 0 : i32
    %c0_i32_1 = arith.constant 0 : i32
    return %c0_i32, %c0_i32_0 : i32, i32
  }
  func.func @transform_3(%arg0: i32) -> (i32, i32) {
    %c0_i32 = arith.constant 0 : i32
    %c0_i32_0 = arith.constant 0 : i32
    %c0_i32_1 = arith.constant 0 : i32
    return %c0_i32, %c0_i32_0 : i32, i32
  }
  func.func @transform_4(%arg0: i32) -> (i32, i32) {
    %c0_i32 = arith.constant 0 : i32
    %c0_i32_0 = arith.constant 0 : i32
    %c0_i32_1 = arith.constant 0 : i32
    return %c0_i32, %c0_i32_0 : i32, i32
  }
  func.func @transform_5(%arg0: i32) -> (i32, i32) {
    %c0_i32 = arith.constant 0 : i32
    %c0_i32_0 = arith.constant 0 : i32
    return %arg0, %c0_i32 : i32, i32
  }
}

</mosaic_0001>

<llo_original>
// kernel: tpu_custom_call.1
$region0: #{tpu_custom_call.1}
  #allocation0 [shape = 'u32[]', space=smem, size = 0x4, offset = 0x4, fixed_abs, tag = 'smem constant byte address 0x4 - core index']
  #allocation1 [shape = 'u32[144,128]{1,0:T(1,128)}', space=vmem, size = 0x12000, scoped, tag = 'internal scratch']
  %s0 = inlined_call_operand.hbm [shape: bf16[8,32], index: 0, kind: input, shape index: {}]
  %s1 = inlined_call_operand.hbm [shape: bf16[32,64], index: 1, kind: input, shape index: {}]
  %s2 = inlined_call_operand.vmem [shape: f32[1,64], index: 2, kind: input, shape index: {}]
  %s3 = inlined_call_operand.hbm [shape: bf16[64,128], index: 3, kind: input, shape index: {}]
  %s4 = inlined_call_operand.vmem [shape: f32[1,128], index: 4, kind: input, shape index: {}]
  %s5 = inlined_call_operand.hbm [shape: f32[8,128], index: 5, kind: output, shape index: {}]
  %s6 = sld [smem:[#allocation0]]
  $region42: #{tpu_custom_call.1} parent=0
    _
  %s8 = ssub.s32 1, %s6
  %s9 = scalar_select 0, %s8, %s6
  $region1: #{tpu_custom_call.1} parent=0
    #allocation2 [shape = 'u8[2048]{0}', space=vmem, size = 0x800, scoped, tag = 'input window, operand 0, single buffered']
    #allocation3 [shape = 's32[1]{0}', space=sflag, size = 0x4, scoped, tag = 'scoped memory for tpu_custom_call.1']
    #allocation4 [shape = 's32[1]{0}', space=sflag, size = 0x4, scoped, tag = 'scoped memory for tpu_custom_call.1']
    #allocation5 [shape = 'u8[8192]{0}', space=vmem, size = 0x2000, scoped, tag = 'input window, operand 1, single buffered']
    #allocation6 [shape = 's32[1]{0}', space=sflag, size = 0x4, scoped, tag = 'scoped memory for tpu_custom_call.1']
    #allocation7 [shape = 'u8[16384]{0}', space=vmem, size = 0x4000, scoped, tag = 'input window, operand 3, single buffered']
    #allocation8 [shape = 'u8[4096]{0}', space=vmem, size = 0x1000, scoped, tag = 'output window, operand 0, single buffered']
    %10 = vsyncpa [#allocation3], 0
    %11 = vsyncpa [#allocation6], 0
    %12 = vsyncpa [#allocation4], 0
    // Predicated region
    $region2: #{tpu_custom_call.1} parent=1 // pred_check
      _
    $region3: #{tpu_custom_call.1} parent=1 // pred_check_branch
      %14 = sbr.rel (0) target = $region5
    $region4: #{tpu_custom_call.1} parent=1 // pred_region
      %s16 = ssub.s32 64, 64
      %17 = vsyncadd [#allocation3], %s16
      %s19 = sshll.u32 [#allocation2], 4
      %s20 = int_to_ptr.vmem [resolvable:$true] %s19
      %22 = dma.hbm_to_vmem [thread:$0]  %s0, 64, %s20, [#allocation3]
    $region5: #{tpu_custom_call.1} parent=1 // pred_fallthru
      _
    // Predicated region
    $region6: #{tpu_custom_call.1} parent=1 // pred_check
      _
    $region7: #{tpu_custom_call.1} parent=1 // pred_check_branch
      %24 = sbr.rel (0) target = $region9
    $region8: #{tpu_custom_call.1} parent=1 // pred_region
      %s26 = ssub.s32 256, 256
      %27 = vsyncadd [#allocation6], %s26
      %s28 = sshll.u32 [#allocation5], 4
      %s29 = int_to_ptr.vmem [resolvable:$true] %s28
      %34 = dma.hbm_to_vmem [thread:$0]  %s1, 256, %s29, [#allocation6], 64, 64, 4
    $region9: #{tpu_custom_call.1} parent=1 // pred_fallthru
      _
    // Predicated region
    $region10: #{tpu_custom_call.1} parent=1 // pred_check
      _
    $region11: #{tpu_custom_call.1} parent=1 // pred_check_branch
      %36 = sbr.rel (0) target = $region13
    $region12: #{tpu_custom_call.1} parent=1 // pred_region
      _
    $region13: #{tpu_custom_call.1} parent=1 // pred_fallthru
      _
    // Predicated region
    $region14: #{tpu_custom_call.1} parent=1 // pred_check
      _
    $region15: #{tpu_custom_call.1} parent=1 // pred_check_branch
      %38 = sbr.rel (0) target = $region17
    $region16: #{tpu_custom_call.1} parent=1 // pred_region
      %s40 = ssub.s32 512, 512
      %41 = vsyncadd [#allocation6], %s40
      %s42 = sshll.u32 [#allocation7], 4
      %s43 = int_to_ptr.vmem [resolvable:$true] %s42
      %48 = dma.hbm_to_vmem [thread:$0]  %s3, 512, %s43, [#allocation6], 64, 64, 4
    $region17: #{tpu_custom_call.1} parent=1 // pred_fallthru
      _
    // Predicated region
    $region18: #{tpu_custom_call.1} parent=1 // pred_check
      _
    $region19: #{tpu_custom_call.1} parent=1 // pred_check_branch
      %50 = sbr.rel (0) target = $region21
    $region20: #{tpu_custom_call.1} parent=1 // pred_region
      _
    $region21: #{tpu_custom_call.1} parent=1 // pred_fallthru
      _
    // Predicated region
    $region22: #{tpu_custom_call.1} parent=1 // pred_check
      _
    $region23: #{tpu_custom_call.1} parent=1 // pred_check_branch
      %52 = sbr.rel (0) target = $region25
    $region24: #{tpu_custom_call.1} parent=1 // pred_region
      %53 = dma.done [#allocation3], 64
    $region25: #{tpu_custom_call.1} parent=1 // pred_fallthru
      _
    // Predicated region
    $region26: #{tpu_custom_call.1} parent=1 // pred_check
      _
    $region27: #{tpu_custom_call.1} parent=1 // pred_check_branch
      %55 = sbr.rel (0) target = $region29
    $region28: #{tpu_custom_call.1} parent=1 // pred_region
      %56 = dma.done [#allocation6], 256
    $region29: #{tpu_custom_call.1} parent=1 // pred_fallthru
      _
    // Predicated region
    $region30: #{tpu_custom_call.1} parent=1 // pred_check
      _
    $region31: #{tpu_custom_call.1} parent=1 // pred_check_branch
      %58 = sbr.rel (0) target = $region33
    $region32: #{tpu_custom_call.1} parent=1 // pred_region
      %59 = dma.done [#allocation6], 512
    $region33: #{tpu_custom_call.1} parent=1 // pred_fallthru
      _
    %v61 = vld [vmem:[#allocation2] sm:$0xf]
    %v62 = vld [vmem:[#allocation5] sm:$0xf]
    %v63 = vld [vmem:[#allocation5 + $0x4] sm:$0xf]
    %v64 = vld [vmem:[#allocation5 + $0x8] sm:$0xf]
    %v65 = vld [vmem:[#allocation5 + $0xc] sm:$0xf]
    %v66 = vld [vmem:[%s2] sm:$0x1]
    %v68 = vlaneseq
    %v69 = vshrl.u32 %v68, 7
    %v70 = vsub.s32 0, %v69
    %v71 = vrot.slane %v66, %v70
    %v77 = vunpack.c.l.b16 %v62
    %v78 = vunpack.c.l.b16 %v63
    %v79 = vunpack.c.l.b16 %v64
    %v80 = vunpack.c.l.b16 %v65
    %v81 = vpack.c.b16 %v78, %v77
    %v82 = vpack.c.b16 %v80, %v79
    %vm85 = vcmask 261120
    %v87 = vsel %vm85, %v61, 0
    %89 = vmatprep.subr.bf16.mxu0 0
    %90 = vmatpush1.bf16.msra.mxu0 %v81
    %91 = vmatprep.subr.bf16.mxu0 0
    %92 = vmatpush1.bf16.msra.mxu0 %v82
    %93 = vmatprep.subr.bf16.mxu0 0
    %94 = vmatpush1.bf16.msra.mxu0 0
    %95 = vmatprep.subr.bf16.mxu0 0
    %96 = vmatpush1.bf16.msra.mxu0 0
    %97 = vmatprep.subr.bf16.mxu0 0
    %98 = vmatpush1.bf16.msra.mxu0 0
    %99 = vmatprep.subr.bf16.mxu0 0
    %100 = vmatpush1.bf16.msra.mxu0 0
    %101 = vmatprep.subr.bf16.mxu0 0
    %102 = vmatpush1.bf16.msra.mxu0 0
    %103 = vmatprep.subr.bf16.mxu0 0
    %104 = vmatpush1.bf16.msra.mxu0 0
    %105 = vmatprep.subr.bf16.mxu0 0
    %106 = vmatpush1.bf16.msra.mxu0 0
    %107 = vmatprep.subr.bf16.mxu0 0
    %108 = vmatpush1.bf16.msra.mxu0 0
    %109 = vmatprep.subr.bf16.mxu0 0
    %110 = vmatpush1.bf16.msra.mxu0 0
    %111 = vmatprep.subr.bf16.mxu0 0
    %112 = vmatpush1.bf16.msra.mxu0 0
    %113 = vmatprep.subr.bf16.mxu0 0
    %114 = vmatpush1.bf16.msra.mxu0 0
    %115 = vmatprep.subr.bf16.mxu0 0
    %116 = vmatpush1.bf16.msra.mxu0 0
    %117 = vmatprep.subr.bf16.mxu0 0
    %118 = vmatpush1.bf16.msra.mxu0 0
    %119 = vmatprep.subr.bf16.mxu0 0
    %120 = vmatpush1.bf16.msra.mxu0 0
    %121 = vmatprep.mubr.bf16.mxu0 0
    %122 = vmatmul.mubr.bf16.gmra.mrb[0].mxu0 %v87
    %v123 = vpop.f32.mrb[0].mxu0
    %v124 = vadd.f32 %v71, %v123
    %v125 = vpop.f32.mrb[0].mxu0
    %v126 = vpop.f32.mrb[0].mxu0
    %v127 = vpop.f32.mrb[0].mxu0
    %128 = vdwg.mxu0
    %v129 = vmax.f32 %v124, 0.0
    %v130 = vpack.c.bf16 %v129, %v129
    %v131 = vld [vmem:[#allocation7] sm:$0xf]
    %v132 = vld [vmem:[#allocation7 + $0x4] sm:$0xf]
    %v133 = vld [vmem:[#allocation7 + $0x8] sm:$0xf]
    %v134 = vld [vmem:[#allocation7 + $0xc] sm:$0xf]
    %v135 = vld [vmem:[#allocation7 + $0x10] sm:$0xf]
    %v136 = vld [vmem:[#allocation7 + $0x14] sm:$0xf]
    %v137 = vld [vmem:[#allocation7 + $0x18] sm:$0xf]
    %v138 = vld [vmem:[#allocation7 + $0x1c] sm:$0xf]
    %v139 = vld [vmem:[%s4] sm:$0x1]
    %v141 = vlaneseq
    %v142 = vshrl.u32 %v141, 7
    %v143 = vsub.s32 0, %v142
    %v144 = vrot.slane %v139, %v143
    %v154 = vunpack.c.l.b16 %v131
    %v155 = vunpack.c.l.b16 %v132
    %v156 = vunpack.c.l.b16 %v133
    %v157 = vunpack.c.l.b16 %v134
    %v158 = vunpack.c.l.b16 %v135
    %v159 = vunpack.c.l.b16 %v136
    %v160 = vunpack.c.l.b16 %v137
    %v161 = vunpack.c.l.b16 %v138
    %v162 = vpack.c.b16 %v155, %v154
    %v163 = vpack.c.b16 %v157, %v156
    %v164 = vpack.c.b16 %v159, %v158
    %v165 = vpack.c.b16 %v161, %v160
    %vm170 = vcmask 523264
    %v172 = vsel %vm170, %v130, 0
    %174 = vmatprep.subr.bf16.mxu0 0
    %175 = vmatpush1.bf16.msra.mxu0 %v162
    %176 = vmatprep.subr.bf16.mxu0 0
    %177 = vmatpush1.bf16.msra.mxu0 %v163
    %178 = vmatprep.subr.bf16.mxu0 0
    %179 = vmatpush1.bf16.msra.mxu0 %v164
    %180 = vmatprep.subr.bf16.mxu0 0
    %181 = vmatpush1.bf16.msra.mxu0 %v165
    %182 = vmatprep.subr.bf16.mxu0 0
    %183 = vmatpush1.bf16.msra.mxu0 0
    %184 = vmatprep.subr.bf16.mxu0 0
    %185 = vmatpush1.bf16.msra.mxu0 0
    %186 = vmatprep.subr.bf16.mxu0 0
    %187 = vmatpush1.bf16.msra.mxu0 0
    %188 = vmatprep.subr.bf16.mxu0 0
    %189 = vmatpush1.bf16.msra.mxu0 0
    %190 = vmatprep.subr.bf16.mxu0 0
    %191 = vmatpush1.bf16.msra.mxu0 0
    %192 = vmatprep.subr.bf16.mxu0 0
    %193 = vmatpush1.bf16.msra.mxu0 0
    %194 = vmatprep.subr.bf16.mxu0 0
    %195 = vmatpush1.bf16.msra.mxu0 0
    %196 = vmatprep.subr.bf16.mxu0 0
    %197 = vmatpush1.bf16.msra.mxu0 0
    %198 = vmatprep.subr.bf16.mxu0 0
    %199 = vmatpush1.bf16.msra.mxu0 0
    %200 = vmatprep.subr.bf16.mxu0 0
    %201 = vmatpush1.bf16.msra.mxu0 0
    %202 = vmatprep.subr.bf16.mxu0 0
    %203 = vmatpush1.bf16.msra.mxu0 0
    %204 = vmatprep.subr.bf16.mxu0 0
    %205 = vmatpush1.bf16.msra.mxu0 0
    %206 = vmatprep.mubr.bf16.mxu0 0
    %207 = vmatmul.mubr.bf16.gmra.mrb[0].mxu0 %v172
    %v208 = vpop.f32.mrb[0].mxu0
    %v209 = vadd.f32 %v144, %v208
    %v210 = vpop.f32.mrb[0].mxu0
    %v211 = vpop.f32.mrb[0].mxu0
    %v212 = vpop.f32.mrb[0].mxu0
    %213 = vdwg.mxu0
    %214 = vmax.xlane.f32.xlu0 %v209
    %v215 = vpop.xlane.xlu0 %214
    %v216 = vsub.f32 %v209, %v215
    %v217 = vmul.f32 %v216, 1.442695
    %v218 = vpow.pop %v217
    %219 = vadd.xlane.f32.xlu0 %v218
    %v220 = vpop.xlane.xlu0 %219
    %v221 = vlog2.pop %v220
    %v222 = vmul.f32 %v221, 0.6931472
    %v223 = vsub.f32 %v216, %v222
    %224 = vst [vmem:[#allocation8] sm:$0xff] %v223
    // Predicated region
    $region34: #{tpu_custom_call.1} parent=1 // pred_check
      _
    $region35: #{tpu_custom_call.1} parent=1 // pred_check_branch
      %226 = sbr.rel (0) target = $region37
    $region36: #{tpu_custom_call.1} parent=1 // pred_region
      %s228 = ssub.s32 128, 128
      %229 = vsyncadd [#allocation4], %s228
      %s231 = sshll.u32 [#allocation8], 4
      %s232 = int_to_ptr.vmem [resolvable:$true] %s231
      %234 = dma.vmem_to_hbm [thread:$0]  %s232, 128, %s5, [#allocation4]
    $region37: #{tpu_custom_call.1} parent=1 // pred_fallthru
      _
    // Predicated region
    $region38: #{tpu_custom_call.1} parent=1 // pred_check
      _
    $region39: #{tpu_custom_call.1} parent=1 // pred_check_branch
      %236 = sbr.rel (0) target = $region41
    $region40: #{tpu_custom_call.1} parent=1 // pred_region
      %237 = dma.done [#allocation4], 128
    $region41: #{tpu_custom_call.1} parent=1 // pred_fallthru
      _
    %238 = vsyncpa [#allocation3], 1
    %239 = vsyncpa [#allocation6], 1
    %240 = vsyncpa [#allocation4], 1

</llo_original>
